<compile_context>
chip_gen: v5e
topology: v5e:2x2
jax: 0.10.0
libtpu: 0.0.40
codegen_flags: <defaults>
</compile_context>

<pallas_src>
import jax
import jax.numpy as jnp
from jax.experimental import pallas as pl
from jax.experimental.pallas import tpu as pltpu

LANES = 128
SUBLANES = 8
DEFAULT_BLOCK_ROWS = 4096            # (4096, 128) f32 = 2 MiB per input block
VMEM_LIMIT_BYTES = 32 * 1024 * 1024  # explicit: covers v5e's 16 MiB default


def _round_up(a, b):
    return ((a + b - 1) // b) * b


def _sublane_multiple(dtype):
    itemsize = jnp.dtype(dtype).itemsize
    if itemsize >= 4:
        return 8
    if itemsize == 2:
        return 16
    return 32


def _tensorcore_splits():
    """2-way split only on multi-TensorCore chips (v7x); 1 on v5e/v6e."""
    try:
        kind = jax.devices()[0].device_kind.lower()
    except Exception:
        return 1
    return 2 if ("v7" in kind or "7x" in kind) else 1


def _make_dice_kernel(rows, block_rows, blocks_per_split, needs_mask):
    """rows / block_rows / blocks_per_split / needs_mask are static."""
    groups = block_rows // SUBLANES

    def kernel(x_ref, y_ref, inter_out, denom_out):
        s = pl.program_id(0)   # split (CORE_PARALLEL across TCs on v7x)
        j = pl.program_id(1)   # reduction step within the split ("arbitrary")

        @pl.when(j == 0)
        def _():
            inter_out[...] = jnp.zeros_like(inter_out)
            denom_out[...] = jnp.zeros_like(denom_out)

        x = x_ref[...].astype(jnp.float32)
        y = y_ref[...].astype(jnp.float32)

        def accumulate(xv, yv):
            # Fold the whole block down to one (8, 128) tile per accumulator
            # with pure VPU adds, then accumulate into the resident output
            # block (no full-block scratch round-trip).
            xr = xv.reshape(groups, SUBLANES, LANES)
            yr = yv.reshape(groups, SUBLANES, LANES)
            inter_out[...] += jnp.sum(xr * yr, axis=0)
            denom_out[...] += jnp.sum(xr + yr, axis=0)   # sum(x)+sum(y) fused

        if needs_mask:
            # Logical (unclamped) block index.
            blk = s * blocks_per_split + j
            is_full = (blk + 1) * block_rows <= rows

            @pl.when(is_full)
            def _():
                accumulate(x, y)

            @pl.when(jnp.logical_not(is_full))
            def _():
                # Only the partial tail block (or a clamped duplicate block on
                # the v7x split path) pays for the iota + where mask.
                row_ids = blk * block_rows + jax.lax.broadcasted_iota(
                    jnp.int32, (block_rows, LANES), 0)
                valid = row_ids < rows
                accumulate(jnp.where(valid, x, 0.0),
                           jnp.where(valid, y, 0.0))
        else:
            accumulate(x, y)

    return kernel


def dice_loss(inputs, target, *, block_rows=None, num_splits=None):
    """Pallas implementation of DiceLoss.forward (smooth=1.0)."""
    smooth = jnp.float32(1.0)

    # Same element ordering as tensor.view(-1); ravel of a contiguous array is
    # free.  No dtype cast here — done in-kernel.
    x1 = jnp.ravel(inputs)
    y1 = jnp.ravel(target)
    n = x1.shape[0]

    # Lane-misaligned tail (< 128 elements): tiny plain-jnp reduction.
    n_lane = (n // LANES) * LANES
    if n_lane != n:
        x_tail = x1[n_lane:].astype(jnp.float32)
        y_tail = y1[n_lane:].astype(jnp.float32)
        tail_inter = jnp.sum(x_tail * y_tail)
        tail_denom = jnp.sum(x_tail) + jnp.sum(y_tail)
        # TODO(synk): this prefix slice may still materialize a copy when
        # numel % 128 != 0 (rare for image tensors); avoiding it needs an
        # in-kernel ragged-lane mask on a 1-D layout, which Mosaic's 2-D
        # iota/layout rules make awkward.
        x1 = x1[:n_lane]
        y1 = y1[:n_lane]
    else:
        tail_inter = jnp.float32(0.0)
        tail_denom = jnp.float32(0.0)

    rows = n_lane // LANES
    if rows == 0:  # fewer than 128 elements total — no kernel needed
        dice = (2.0 * tail_inter + smooth) / (tail_denom + smooth)
        return 1.0 - dice

    x2 = x1.reshape(rows, LANES)
    y2 = y1.reshape(rows, LANES)

    # Tile sizing: multiple of the dtype's min sublane tile, capped at array.
    sub_mult = max(_sublane_multiple(x2.dtype), _sublane_multiple(y2.dtype))
    if block_rows is None:
        block_rows = DEFAULT_BLOCK_ROWS
    block_rows = _round_up(min(block_rows, _round_up(rows, sub_mult)), sub_mult)
    rows_blocks = pl.cdiv(rows, block_rows)

    # Split the reduction across TensorCores only on multi-TC chips (v7x).
    if num_splits is None:
        num_splits = _tensorcore_splits()
    num_splits = num_splits if rows_blocks >= 2 else 1
    blocks_per_split = pl.cdiv(rows_blocks, num_splits)
    needs_mask = (num_splits * blocks_per_split * block_rows != rows)

    if rows_blocks % num_splits == 0:
        def in_map(s, j):
            return (s * blocks_per_split + j, 0)
    else:
        last_block = rows_blocks - 1

        def in_map(s, j):
            # Clamp so no block is fully out of bounds; the in-kernel row mask
            # zeroes the duplicated data.
            return (jnp.minimum(s * blocks_per_split + j, last_block), 0)

    kernel = _make_dice_kernel(rows, block_rows, blocks_per_split, needs_mask)

    if num_splits == 2:
        dim_sem = (pltpu.CORE_PARALLEL, pltpu.ARBITRARY)
    else:
        dim_sem = ("arbitrary", "arbitrary")

    in_bytes = (x2.dtype.itemsize + y2.dtype.itemsize) * rows * LANES
    out_bytes = 2 * num_splits * SUBLANES * LANES * 4
    cost = pl.CostEstimate(flops=4 * rows * LANES, transcendentals=0,
                           bytes_accessed=in_bytes + out_bytes)

    inter_parts, denom_parts = pl.pallas_call(
        kernel,
        out_shape=(
            jax.ShapeDtypeStruct((num_splits * SUBLANES, LANES), jnp.float32),
            jax.ShapeDtypeStruct((num_splits * SUBLANES, LANES), jnp.float32),
        ),
        grid_spec=pltpu.PrefetchScalarGridSpec(
            num_scalar_prefetch=0,
            grid=(num_splits, blocks_per_split),
            in_specs=[
                pl.BlockSpec((block_rows, LANES), in_map),
                pl.BlockSpec((block_rows, LANES), in_map),
            ],
            out_specs=[
                pl.BlockSpec((SUBLANES, LANES), lambda s, j: (s, 0)),
                pl.BlockSpec((SUBLANES, LANES), lambda s, j: (s, 0)),
            ],
        ),
        compiler_params=pltpu.CompilerParams(
            dimension_semantics=dim_sem,
            vmem_limit_bytes=VMEM_LIMIT_BYTES,
        ),
        cost_estimate=cost,
    )(x2, y2)

    intersection = jnp.sum(inter_parts) + tail_inter
    denom = jnp.sum(denom_parts) + tail_denom
    dice = (2.0 * intersection + smooth) / (denom + smooth)
    return 1.0 - dice


def dice_loss_ref(inputs, target):
    smooth = 1.0
    xf = jnp.ravel(inputs).astype(jnp.float32)
    yf = jnp.ravel(target).astype(jnp.float32)
    inter = jnp.sum(xf * yf)
    dice = (2.0 * inter + smooth) / (jnp.sum(xf) + jnp.sum(yf) + smooth)
    return 1.0 - dice


def _check(loss, ref, tag):
    assert jnp.allclose(loss, ref, rtol=1e-5, atol=1e-6), (tag, float(loss), float(ref))


if __name__ == "__main__":
    # Case 1: NCHW (2, 4, 16, 16) — lane-aligned, single full block.
    k1, k2 = jax.random.split(jax.random.PRNGKey(0))
    x = jax.nn.sigmoid(jax.random.normal(k1, (2, 4, 16, 16), dtype=jnp.float32))
    t = (jax.random.uniform(k2, (2, 4, 16, 16)) > 0.5).astype(jnp.float32)
    loss = dice_loss(x, t)
    jax.block_until_ready(loss)
    _check(loss, dice_loss_ref(x, t), "case1")

    # Case 2: lane-misaligned total size (exercises the jnp tail path).
    k3, k4 = jax.random.split(jax.random.PRNGKey(1))
    x2 = jax.nn.sigmoid(jax.random.normal(k3, (2, 3, 37, 37), dtype=jnp.float32))
    t2 = (jax.random.uniform(k4, (2, 3, 37, 37)) > 0.5).astype(jnp.float32)
    loss2 = dice_loss(x2, t2)
    jax.block_until_ready(loss2)
    _check(loss2, dice_loss_ref(x2, t2), "case2")

    # Case 3: bf16 input, single partial block (exercises the gated row mask
    # and the 16-sublane tile rounding).
    k5, k6 = jax.random.split(jax.random.PRNGKey(2))
    x3 = jax.nn.sigmoid(
        jax.random.normal(k5, (2, 4, 200, 200), dtype=jnp.float32)
    ).astype(jnp.bfloat16)
    t3 = (jax.random.uniform(k6, (2, 4, 200, 200)) > 0.5).astype(jnp.bfloat16)
    loss3 = dice_loss(x3, t3)
    jax.block_until_ready(loss3)
    _check(loss3, dice_loss_ref(x3, t3), "case3")

    # Case 4: same data, forced small block_rows -> multi-step reduction on the
    # "arbitrary" axis with unmasked interior blocks + masked tail block.
    loss4 = dice_loss(x3, t3, block_rows=512)
    jax.block_until_ready(loss4)
    _check(loss4, dice_loss_ref(x3, t3), "case4")

    print("KERNEL_OK")
</pallas_src>

<mosaic_0001>
module attributes {stable_mosaic.version = 11 : i64} {
  func.func @kernel(%arg0: i32, %arg1: i32, %arg2: memref<16x128xf32, #tpu.memory_space<vmem>>, %arg3: memref<16x128xf32, #tpu.memory_space<vmem>>, %arg4: memref<8x128xf32, #tpu.memory_space<vmem>>, %arg5: memref<8x128xf32, #tpu.memory_space<vmem>>) attributes {dimension_semantics = [#tpu.dimension_semantics<arbitrary>, #tpu.dimension_semantics<arbitrary>], iteration_bounds = array<i64: 1, 1>, scalar_prefetch = 0 : i64, scratch_operands = 0 : i64, tpu.core_type = #tpu.core_type<tc>, window_params = [{transform_indices = @transform_0, window_bounds = array<i64: 16, 128>}, {transform_indices = @transform_1, window_bounds = array<i64: 16, 128>}, {transform_indices = @transform_2, window_bounds = array<i64: 8, 128>}, {transform_indices = @transform_3, window_bounds = array<i64: 8, 128>}]} {
    %c0_i32 = arith.constant 0 : i32
    %0 = arith.cmpi eq, %arg1, %c0_i32 : i32
    %1 = arith.extui %0 : i1 to i32
    %c0_i32_0 = arith.constant 0 : i32
    %2 = arith.cmpi ne, %1, %c0_i32_0 : i32
    scf.if %2 {
      %cst_13 = arith.constant 0.000000e+00 : f32
      %17 = vector.broadcast %cst_13 : f32 to vector<8x128xf32>
      %c0_14 = arith.constant 0 : index
      %c0_15 = arith.constant 0 : index
      %18 = vector.load %arg4[%c0_14, %c0_15] : memref<8x128xf32, #tpu.memory_space<vmem>>, vector<8x128xf32>
      tpu.vector_store %arg4[%c0_14, %c0_15], %17 {strides = array<i32>} : memref<8x128xf32, #tpu.memory_space<vmem>>, vector<8x128xf32>,
      %cst_16 = arith.constant 0.000000e+00 : f32
      %19 = vector.broadcast %cst_16 : f32 to vector<8x128xf32>
      %c0_17 = arith.constant 0 : index
      %c0_18 = arith.constant 0 : index
      %20 = vector.load %arg5[%c0_17, %c0_18] : memref<8x128xf32, #tpu.memory_space<vmem>>, vector<8x128xf32>
      tpu.vector_store %arg5[%c0_17, %c0_18], %19 {strides = array<i32>} : memref<8x128xf32, #tpu.memory_space<vmem>>, vector<8x128xf32>,
    } else {
    }
    %c0 = arith.constant 0 : index
    %c0_1 = arith.constant 0 : index
    %3 = vector.load %arg2[%c0, %c0_1] : memref<16x128xf32, #tpu.memory_space<vmem>>, vector<16x128xf32>
    %c0_2 = arith.constant 0 : index
    %c0_3 = arith.constant 0 : index
    %4 = vector.load %arg3[%c0_2, %c0_3] : memref<16x128xf32, #tpu.memory_space<vmem>>, vector<16x128xf32>
    %5 = vector.shape_cast %3 : vector<16x128xf32> to vector<2x8x128xf32>
    %6 = vector.shape_cast %4 : vector<16x128xf32> to vector<2x8x128xf32>
    %c0_4 = arith.constant 0 : index
    %c0_5 = arith.constant 0 : index
    %7 = vector.load %arg4[%c0_4, %c0_5] : memref<8x128xf32, #tpu.memory_space<vmem>>, vector<8x128xf32>
    %8 = arith.mulf %5, %6 : vector<2x8x128xf32>
    %cst = arith.constant dense<0.000000e+00> : vector<8x128xf32>
    %9 = vector.multi_reduction <add>, %8, %cst [0] : vector<2x8x128xf32> to vector<8x128xf32>
    %10 = arith.addf %7, %9 : vector<8x128xf32>
    %c0_6 = arith.constant 0 : index
    %c0_7 = arith.constant 0 : index
    %11 = vector.load %arg4[%c0_6, %c0_7] : memref<8x128xf32, #tpu.memory_space<vmem>>, vector<8x128xf32>
    tpu.vector_store %arg4[%c0_6, %c0_7], %10 {strides = array<i32>} : memref<8x128xf32, #tpu.memory_space<vmem>>, vector<8x128xf32>,
    %c0_8 = arith.constant 0 : index
    %c0_9 = arith.constant 0 : index
    %12 = vector.load %arg5[%c0_8, %c0_9] : memref<8x128xf32, #tpu.memory_space<vmem>>, vector<8x128xf32>
    %13 = arith.addf %5, %6 : vector<2x8x128xf32>
    %cst_10 = arith.constant dense<0.000000e+00> : vector<8x128xf32>
    %14 = vector.multi_reduction <add>, %13, %cst_10 [0] : vector<2x8x128xf32> to vector<8x128xf32>
    %15 = arith.addf %12, %14 : vector<8x128xf32>
    %c0_11 = arith.constant 0 : index
    %c0_12 = arith.constant 0 : index
    %16 = vector.load %arg5[%c0_11, %c0_12] : memref<8x128xf32, #tpu.memory_space<vmem>>, vector<8x128xf32>
    tpu.vector_store %arg5[%c0_11, %c0_12], %15 {strides = array<i32>} : memref<8x128xf32, #tpu.memory_space<vmem>>, vector<8x128xf32>,
    return
  }
  func.func @transform_0(%arg0: i32, %arg1: i32) -> (i32, i32) {
    %c1_i32 = arith.constant 1 : i32
    %0 = arith.muli %arg0, %c1_i32 : i32
    %1 = arith.addi %0, %arg1 : i32
    %c0_i32 = arith.constant 0 : i32
    %c0_i32_0 = arith.constant 0 : i32
    return %1, %c0_i32 : i32, i32
  }
  func.func @transform_1(%arg0: i32, %arg1: i32) -> (i32, i32) {
    %c1_i32 = arith.constant 1 : i32
    %0 = arith.muli %arg0, %c1_i32 : i32
    %1 = arith.addi %0, %arg1 : i32
    %c0_i32 = arith.constant 0 : i32
    %c0_i32_0 = arith.constant 0 : i32
    return %1, %c0_i32 : i32, i32
  }
  func.func @transform_2(%arg0: i32, %arg1: i32) -> (i32, i32) {
    %c0_i32 = arith.constant 0 : i32
    %c0_i32_0 = arith.constant 0 : i32
    return %arg0, %c0_i32 : i32, i32
  }
  func.func @transform_3(%arg0: i32, %arg1: i32) -> (i32, i32) {
    %c0_i32 = arith.constant 0 : i32
    %c0_i32_0 = arith.constant 0 : i32
    return %arg0, %c0_i32 : i32, i32
  }
}

</mosaic_0001>

<llo_original>
// kernel: tpu_custom_call.1
$region0: #{tpu_custom_call.1}
  #allocation0 [shape = 'u32[]', space=smem, size = 0x4, offset = 0x4, fixed_abs, tag = 'smem constant byte address 0x4 - core index']
  #allocation1 [shape = 'u32[72,128]{1,0:T(1,128)}', space=vmem, size = 0x9000, scoped, tag = 'internal scratch']
  %s0 = inlined_call_operand.hbm [shape: f32[16,128], index: 0, kind: input, shape index: {}]
  %s1 = inlined_call_operand.hbm [shape: f32[16,128], index: 1, kind: input, shape index: {}]
  %s2 = inlined_call_operand.hbm [shape: f32[8,128], index: 2, kind: output, shape index: {0}]
  %s3 = inlined_call_operand.hbm [shape: f32[8,128], index: 3, kind: output, shape index: {1}]
  %4 = xla_tuple %s2, %s3
  %s5 = sld [smem:[#allocation0]]
  $region38: #{tpu_custom_call.1} parent=0
    _
  %s7 = ssub.s32 1, %s5
  %s8 = scalar_select 0, %s7, %s5
  $region1: #{tpu_custom_call.1} parent=0
    #allocation2 [shape = 'u8[8192]{0}', space=vmem, size = 0x2000, scoped, tag = 'input window, operand 0, single buffered']
    #allocation3 [shape = 's32[1]{0}', space=sflag, size = 0x4, scoped, tag = 'scoped memory for tpu_custom_call.1']
    #allocation4 [shape = 's32[1]{0}', space=sflag, size = 0x4, scoped, tag = 'scoped memory for tpu_custom_call.1']
    #allocation5 [shape = 'u8[8192]{0}', space=vmem, size = 0x2000, scoped, tag = 'input window, operand 1, single buffered']
    #allocation6 [shape = 's32[1]{0}', space=sflag, size = 0x4, scoped, tag = 'scoped memory for tpu_custom_call.1']
    #allocation7 [shape = 'u8[4096]{0}', space=vmem, size = 0x1000, scoped, tag = 'output window, operand 0, single buffered']
    #allocation8 [shape = 'u8[4096]{0}', space=vmem, size = 0x1000, scoped, tag = 'output window, operand 1, single buffered']
    #allocation9 [shape = 's32[1]{0}', space=sflag, size = 0x4, scoped, tag = 'scoped memory for tpu_custom_call.1']
    %9 = vsyncpa [#allocation3], 0
    %10 = vsyncpa [#allocation6], 0
    %11 = vsyncpa [#allocation4], 0
    %12 = vsyncpa [#allocation9], 0
    // Predicated region
    $region2: #{tpu_custom_call.1} parent=1 // pred_check
      _
    $region3: #{tpu_custom_call.1} parent=1 // pred_check_branch
      %14 = sbr.rel (0) target = $region5
    $region4: #{tpu_custom_call.1} parent=1 // pred_region
      %s15 = sadd.s32 0, 0
      %s16 = smul.u32 2, %s15
      %18 = vsyncadd [#allocation3], 0
      %s19 = smul.addr %s16, 8
      %s20 = scalar_lea.hbm %s0, %s19
      %s21 = sshll.u32 %s20, 4
      %s22 = int_to_ptr.hbm [resolvable:$true] %s21
      %s23 = sshll.u32 [#allocation2], 4
      %s24 = int_to_ptr.vmem [resolvable:$true] %s23
      %29 = dma.hbm_to_vmem [thread:$0]  %s22, 256, %s24, [#allocation3], 128, 128, 8
    $region5: #{tpu_custom_call.1} parent=1 // pred_fallthru
      _
    // Predicated region
    $region6: #{tpu_custom_call.1} parent=1 // pred_check
      _
    $region7: #{tpu_custom_call.1} parent=1 // pred_check_branch
      %31 = sbr.rel (0) target = $region9
    $region8: #{tpu_custom_call.1} parent=1 // pred_region
      %s32 = sadd.s32 0, 0
      %s33 = smul.u32 2, %s32
      %35 = vsyncadd [#allocation6], 0
      %s36 = smul.addr %s33, 8
      %s37 = scalar_lea.hbm %s1, %s36
      %s38 = sshll.u32 %s37, 4
      %s39 = int_to_ptr.hbm [resolvable:$true] %s38
      %s40 = sshll.u32 [#allocation5], 4
      %s41 = int_to_ptr.vmem [resolvable:$true] %s40
      %46 = dma.hbm_to_vmem [thread:$0]  %s39, 256, %s41, [#allocation6], 128, 128, 8
    $region9: #{tpu_custom_call.1} parent=1 // pred_fallthru
      _
    // Predicated region
    $region10: #{tpu_custom_call.1} parent=1 // pred_check
      _
    $region11: #{tpu_custom_call.1} parent=1 // pred_check_branch
      %48 = sbr.rel (0) target = $region13
    $region12: #{tpu_custom_call.1} parent=1 // pred_region
      %50 = dma.done [#allocation3], 256
    $region13: #{tpu_custom_call.1} parent=1 // pred_fallthru
      _
    // Predicated region
    $region14: #{tpu_custom_call.1} parent=1 // pred_check
      _
    $region15: #{tpu_custom_call.1} parent=1 // pred_check_branch
      %52 = sbr.rel (0) target = $region17
    $region16: #{tpu_custom_call.1} parent=1 // pred_region
      %54 = dma.done [#allocation6], 256
    $region17: #{tpu_custom_call.1} parent=1 // pred_fallthru
      _
    %s55 = sadd.s32 0, 0
    %s56 = smul.u32 2, %s55
    %s57 = sadd.s32 0, 0
    %s58 = smul.u32 2, %s57
    %p59 = scmp.eq.s32.totalorder 0, 0
    // Predicated region
    $region18: #{tpu_custom_call.1} parent=1 // pred_check
      %p60 = pneg %p59
    $region19: #{tpu_custom_call.1} parent=1 // pred_check_branch
      %62 = sbr.rel (%p60) target = $region21
    $region20: #{tpu_custom_call.1} parent=1 // pred_region
      %63 = vst [vmem:[#allocation7] sm:$0xff] 0.0
      %64 = vst [vmem:[#allocation8] sm:$0xff] 0.0
    $region21: #{tpu_custom_call.1} parent=1 // pred_fallthru
      _
    %v65 = vld [vmem:[#allocation2] sm:$0xff]
    %v66 = vld [vmem:[#allocation2 + $0x8] sm:$0xff]
    %v67 = vld [vmem:[#allocation5] sm:$0xff]
    %v68 = vld [vmem:[#allocation5 + $0x8] sm:$0xff]
    %v69 = vld [vmem:[#allocation7] sm:$0xff]
    %v70 = vmul.f32 %v65, %v67
    %v71 = vmul.f32 %v66, %v68
    %v72 = vadd.f32 %v70, %v71
    %v73 = vadd.f32 %v69, %v72
    %74 = vst [vmem:[#allocation7] sm:$0xff] %v73
    %v75 = vld [vmem:[#allocation8] sm:$0xff]
    %v76 = vadd.f32 %v65, %v67
    %v77 = vadd.f32 %v66, %v68
    %v78 = vadd.f32 %v76, %v77
    %v79 = vadd.f32 %v75, %v78
    %80 = vst [vmem:[#allocation8] sm:$0xff] %v79
    // Predicated region
    $region22: #{tpu_custom_call.1} parent=1 // pred_check
      _
    $region23: #{tpu_custom_call.1} parent=1 // pred_check_branch
      %82 = sbr.rel (0) target = $region25
    $region24: #{tpu_custom_call.1} parent=1 // pred_region
      %84 = vsyncadd [#allocation4], 0
      %s86 = sshll.u32 [#allocation7], 4
      %s87 = int_to_ptr.vmem [resolvable:$true] %s86
      %s88 = sshll.u32 %s2, 4
      %s89 = int_to_ptr.hbm [resolvable:$true] %s88
      %91 = dma.vmem_to_hbm [thread:$0]  %s87, 128, %s89, [#allocation4]
    $region25: #{tpu_custom_call.1} parent=1 // pred_fallthru
      _
    // Predicated region
    $region26: #{tpu_custom_call.1} parent=1 // pred_check
      _
    $region27: #{tpu_custom_call.1} parent=1 // pred_check_branch
      %93 = sbr.rel (0) target = $region29
    $region28: #{tpu_custom_call.1} parent=1 // pred_region
      %95 = vsyncadd [#allocation9], 0
      %s97 = sshll.u32 [#allocation8], 4
      %s98 = int_to_ptr.vmem [resolvable:$true] %s97
      %s99 = sshll.u32 %s3, 4
      %s100 = int_to_ptr.hbm [resolvable:$true] %s99
      %102 = dma.vmem_to_hbm [thread:$0]  %s98, 128, %s100, [#allocation9]
    $region29: #{tpu_custom_call.1} parent=1 // pred_fallthru
      _
    // Predicated region
    $region30: #{tpu_custom_call.1} parent=1 // pred_check
      _
    $region31: #{tpu_custom_call.1} parent=1 // pred_check_branch
      %104 = sbr.rel (0) target = $region33
    $region32: #{tpu_custom_call.1} parent=1 // pred_region
      %106 = dma.done [#allocation4], 128
    $region33: #{tpu_custom_call.1} parent=1 // pred_fallthru
      _
    // Predicated region
    $region34: #{tpu_custom_call.1} parent=1 // pred_check
      _
    $region35: #{tpu_custom_call.1} parent=1 // pred_check_branch
      %108 = sbr.rel (0) target = $region37
    $region36: #{tpu_custom_call.1} parent=1 // pred_region
      %110 = dma.done [#allocation9], 128
    $region37: #{tpu_custom_call.1} parent=1 // pred_fallthru
      _
    %111 = vsyncpa [#allocation3], 1
    %112 = vsyncpa [#allocation6], 1
    %113 = vsyncpa [#allocation4], 1
    %114 = vsyncpa [#allocation9], 1

</llo_original>
